<compile_context>
chip_gen: v7x
topology: tpu7x:2x2x1
jax: 0.10.0
libtpu: 0.0.40
codegen_flags: <defaults>
</compile_context>

<pallas_src>
import functools

import jax
import jax.numpy as jnp
from jax import lax
from jax.experimental import pallas as pl
from jax.experimental.pallas import tpu as pltpu

LANE = 128          # lane width (last dim of every block)
TM_TARGET = 2048    # rows per block: 2048*128*4B = 1 MiB f32 per input block
NUM_SPLITS = 2      # leading "parallel" axis -> the 2 TensorCores on v7x


# ---------------------------------------------------------------------------
# Pallas kernel: per-core partial sum of (pred - target)^2 over row tiles.
# ---------------------------------------------------------------------------
def _sse_kernel(p_ref, t_ref, o_ref, acc_ref, *, tm, rows, nb_per, needs_mask):
    c = pl.program_id(0)   # core-split ("parallel") axis
    i = pl.program_id(1)   # reduction ("arbitrary") axis

    @pl.when(i == 0)
    def _():
        acc_ref[...] = jnp.zeros_like(acc_ref)

    d = p_ref[...].astype(jnp.float32) - t_ref[...].astype(jnp.float32)
    sq = d * d
    if needs_mask:
        # Zero out rows past the end of the array: covers the partial last
        # block and any clamped/duplicated blocks on the second core.
        blk = c * nb_per + i
        row_ids = lax.broadcasted_iota(jnp.int32, (tm, LANE), 0) + blk * tm
        sq = jnp.where(row_ids < rows, sq, 0.0)

    acc_ref[...] += sq            # element-wise; pure VPU, hidden under DMA

    @pl.when(i == pl.num_programs(1) - 1)
    def _():
        o_ref[0, 0] = jnp.sum(acc_ref[...])   # one full reduce per core


def _mse_pallas(pred, target):
    assert pred.shape == target.shape, "pred/target shape mismatch"
    n_elem = int(pred.size)
    flat_p = pred.reshape(-1)
    flat_t = target.reshape(-1)

    tail = n_elem % LANE
    main = n_elem - tail

    # Ragged tail (< 128 elements): tiny plain-JAX sum.
    if tail:
        p_tl = lax.slice(flat_p, (main,), (n_elem,)).astype(jnp.float32)
        t_tl = lax.slice(flat_t, (main,), (n_elem,)).astype(jnp.float32)
        tail_sse = jnp.sum((p_tl - t_tl) ** 2)
    else:
        tail_sse = jnp.float32(0.0)

    if main == 0:
        # Too small for a (rows, 128) slab; pure JAX.
        return tail_sse / jnp.float32(n_elem)

    if tail:
        # TODO(synk): this prefix slice materializes a copy; it is only hit
        # when numel % 128 != 0 (the aligned fast path below is copy-free).
        flat_p = lax.slice(flat_p, (0,), (main,))
        flat_t = lax.slice(flat_t, (0,), (main,))

    rows = main // LANE
    p2d = flat_p.reshape(rows, LANE)
    t2d = flat_t.reshape(rows, LANE)

    # --- tile / grid selection (all static Python ints) ---
    if rows <= TM_TARGET:
        tm = rows                      # single block; block == full array dim
    else:
        tm = TM_TARGET                 # multiple of 32: bf16/int8 friendly
    nb = pl.cdiv(rows, tm)             # total row-blocks
    splits = NUM_SPLITS if nb >= NUM_SPLITS else 1
    nb_per = pl.cdiv(nb, splits)       # row-blocks per core
    needs_mask = (splits * nb_per * tm) != rows

    if splits * nb_per > nb:
        # Over-provisioned grid (odd block count): clamp the block index so
        # the DMA stays in bounds; the in-kernel mask zeroes duplicate data.
        def in_map(c, i):
            return (jnp.minimum(c * nb_per + i, nb - 1), 0)
    else:
        def in_map(c, i):
            return (c * nb_per + i, 0)

    kernel = functools.partial(
        _sse_kernel, tm=tm, rows=rows, nb_per=nb_per, needs_mask=needs_mask
    )

    itemsize = jnp.dtype(pred.dtype).itemsize
    partials = pl.pallas_call(
        kernel,
        out_shape=jax.ShapeDtypeStruct((splits, 1), jnp.float32),
        grid_spec=pltpu.PrefetchScalarGridSpec(
            num_scalar_prefetch=0,
            grid=(splits, nb_per),
            in_specs=[
                pl.BlockSpec((tm, LANE), in_map),
                pl.BlockSpec((tm, LANE), in_map),
            ],
            out_specs=pl.BlockSpec(
                (1, 1), lambda c, i: (c, 0), memory_space=pltpu.SMEM
            ),
            scratch_shapes=[pltpu.VMEM((tm, LANE), jnp.float32)],
        ),
        compiler_params=pltpu.CompilerParams(
            dimension_semantics=("parallel", "arbitrary"),
        ),
        cost_estimate=pl.CostEstimate(
            flops=3 * main,
            transcendentals=0,
            bytes_accessed=2 * main * itemsize + 4 * splits,
        ),
    )(p2d, t2d)

    sse = jnp.sum(partials) + tail_sse
    return sse / jnp.float32(n_elem)


# ---------------------------------------------------------------------------
# Viz_Criterion equivalent.
# ---------------------------------------------------------------------------
class VizCriterionMSE:
    """JAX equivalent of Viz_Criterion('mse', arg_names=['pred','target'])."""

    def __init__(self, arg_names=("pred", "target"), allow_grads=False):
        self.arg_names = list(arg_names)
        self.allow_grads = allow_grads

    def __call__(self, out):
        args = [out[k] for k in self.arg_names]
        if not self.allow_grads:
            # torch.no_grad() equivalent
            args = [jax.lax.stop_gradient(a) for a in args]
        pred, target = args
        return _mse_pallas(pred, target)


if __name__ == "__main__":
    key = jax.random.PRNGKey(0)
    k1, k2, k3, k4, k5, k6 = jax.random.split(key, 6)

    crit = VizCriterionMSE(arg_names=("pred", "target"), allow_grads=False)

    # 1) Primary: small NCHW vision-style input (matches the module spec).
    pred = jax.random.normal(k1, (2, 4, 16, 16), dtype=jnp.float32)
    target = jax.random.normal(k2, (2, 4, 16, 16), dtype=jnp.float32)
    loss = jax.block_until_ready(crit({"pred": pred, "target": target}))
    ref = jnp.mean((pred - target) ** 2)
    assert jnp.allclose(loss, ref, rtol=1e-4, atol=1e-6), (loss, ref)

    # 2) Multi-block path: grid > 1, 2-way core split, boundary mask + clamp.
    p2 = jax.random.normal(k3, (2, 4, 240, 280), dtype=jnp.float32)
    t2 = jax.random.normal(k4, (2, 4, 240, 280), dtype=jnp.float32)
    loss2 = jax.block_until_ready(crit({"pred": p2, "target": t2}))
    ref2 = jnp.mean((p2 - t2) ** 2)
    assert jnp.allclose(loss2, ref2, rtol=1e-4, atol=1e-6), (loss2, ref2)

    # 3) Ragged-tail path (numel % 128 != 0).
    p3 = jax.random.normal(k5, (3, 5, 7, 11), dtype=jnp.float32)
    t3 = jax.random.normal(k6, (3, 5, 7, 11), dtype=jnp.float32)
    loss3 = jax.block_until_ready(crit({"pred": p3, "target": t3}))
    ref3 = jnp.mean((p3 - t3) ** 2)
    assert jnp.allclose(loss3, ref3, rtol=1e-4, atol=1e-6), (loss3, ref3)

    print("KERNEL_OK")
</pallas_src>

<mosaic_0001>
module attributes {stable_mosaic.version = 11 : i64} {
  func.func @_sse_kernel(%arg0: i32, %arg1: i32, %arg2: memref<16x128xf32, #tpu.memory_space<vmem>>, %arg3: memref<16x128xf32, #tpu.memory_space<vmem>>, %arg4: memref<1x1xf32, #tpu.memory_space<smem>>, %arg5: memref<16x128xf32, #tpu.memory_space<vmem>>) attributes {dimension_semantics = [#tpu.dimension_semantics<parallel>, #tpu.dimension_semantics<arbitrary>], iteration_bounds = array<i64: 1, 1>, scalar_prefetch = 0 : i64, scratch_operands = 1 : i64, tpu.core_type = #tpu.core_type<tc>, window_params = [{transform_indices = @transform_0, window_bounds = array<i64: 16, 128>}, {transform_indices = @transform_1, window_bounds = array<i64: 16, 128>}, {transform_indices = @transform_2, window_bounds = array<i64: 1, 1>}]} {
    %c0_i32 = arith.constant 0 : i32
    %0 = arith.cmpi eq, %arg1, %c0_i32 : i32
    %1 = arith.extui %0 : i1 to i32
    %c0_i32_0 = arith.constant 0 : i32
    %2 = arith.cmpi ne, %1, %c0_i32_0 : i32
    scf.if %2 {
      %cst = arith.constant 0.000000e+00 : f32
      %13 = vector.broadcast %cst : f32 to vector<16x128xf32>
      %c0_10 = arith.constant 0 : index
      %c0_11 = arith.constant 0 : index
      %14 = vector.load %arg5[%c0_10, %c0_11] : memref<16x128xf32, #tpu.memory_space<vmem>>, vector<16x128xf32>
      tpu.vector_store %arg5[%c0_10, %c0_11], %13 {strides = array<i32>} : memref<16x128xf32, #tpu.memory_space<vmem>>, vector<16x128xf32>,
    } else {
    }
    %c0 = arith.constant 0 : index
    %c0_1 = arith.constant 0 : index
    %3 = vector.load %arg2[%c0, %c0_1] : memref<16x128xf32, #tpu.memory_space<vmem>>, vector<16x128xf32>
    %c0_2 = arith.constant 0 : index
    %c0_3 = arith.constant 0 : index
    %4 = vector.load %arg3[%c0_2, %c0_3] : memref<16x128xf32, #tpu.memory_space<vmem>>, vector<16x128xf32>
    %5 = arith.subf %3, %4 : vector<16x128xf32>
    %6 = arith.mulf %5, %5 : vector<16x128xf32>
    %c0_4 = arith.constant 0 : index
    %c0_5 = arith.constant 0 : index
    %7 = vector.load %arg5[%c0_4, %c0_5] : memref<16x128xf32, #tpu.memory_space<vmem>>, vector<16x128xf32>
    %8 = arith.addf %7, %6 : vector<16x128xf32>
    %c0_6 = arith.constant 0 : index
    %c0_7 = arith.constant 0 : index
    %9 = vector.load %arg5[%c0_6, %c0_7] : memref<16x128xf32, #tpu.memory_space<vmem>>, vector<16x128xf32>
    tpu.vector_store %arg5[%c0_6, %c0_7], %8 {strides = array<i32>} : memref<16x128xf32, #tpu.memory_space<vmem>>, vector<16x128xf32>,
    %c0_i32_8 = arith.constant 0 : i32
    %10 = arith.cmpi eq, %arg1, %c0_i32_8 : i32
    %11 = arith.extui %10 : i1 to i32
    %c0_i32_9 = arith.constant 0 : i32
    %12 = arith.cmpi ne, %11, %c0_i32_9 : i32
    scf.if %12 {
      %c0_10 = arith.constant 0 : index
      %c0_11 = arith.constant 0 : index
      %13 = vector.load %arg5[%c0_10, %c0_11] : memref<16x128xf32, #tpu.memory_space<vmem>>, vector<16x128xf32>
      %14 = vector.shape_cast %13 : vector<16x128xf32> to vector<1x16x128xf32>
      %cst = arith.constant dense<0.000000e+00> : vector<1xf32>
      %15 = vector.multi_reduction <add>, %14, %cst [1, 2] : vector<1x16x128xf32> to vector<1xf32>
      %16 = vector.shape_cast %15 : vector<1xf32> to vector<1x1x1xf32>
      %17 = vector.extract %16[0, 0, 0] : f32 from vector<1x1x1xf32>
      %c0_12 = arith.constant 0 : index
      %c0_13 = arith.constant 0 : index
      %18 = memref.load %arg4[%c0_12, %c0_13] : memref<1x1xf32, #tpu.memory_space<smem>>
      memref.store %17, %arg4[%c0_12, %c0_13] : memref<1x1xf32, #tpu.memory_space<smem>>
    } else {
    }
    return
  }
  func.func @transform_0(%arg0: i32, %arg1: i32) -> (i32, i32) {
    %c1_i32 = arith.constant 1 : i32
    %0 = arith.muli %arg0, %c1_i32 : i32
    %1 = arith.addi %0, %arg1 : i32
    %c0_i32 = arith.constant 0 : i32
    %c0_i32_0 = arith.constant 0 : i32
    return %1, %c0_i32 : i32, i32
  }
  func.func @transform_1(%arg0: i32, %arg1: i32) -> (i32, i32) {
    %c1_i32 = arith.constant 1 : i32
    %0 = arith.muli %arg0, %c1_i32 : i32
    %1 = arith.addi %0, %arg1 : i32
    %c0_i32 = arith.constant 0 : i32
    %c0_i32_0 = arith.constant 0 : i32
    return %1, %c0_i32 : i32, i32
  }
  func.func @transform_2(%arg0: i32, %arg1: i32) -> (i32, i32) {
    %c0_i32 = arith.constant 0 : i32
    %c0_i32_0 = arith.constant 0 : i32
    return %arg0, %c0_i32 : i32, i32
  }
}

</mosaic_0001>

<llo_original>
// kernel: tpu_custom_call.1
$region0: #{tpu_custom_call.1}
  #allocation0 [shape = 'u32[]', space=smem, size = 0x4, offset = 0x4, fixed_abs, tag = 'smem constant byte address 0x4 - core index']
  #allocation1 [shape = 'u32[144,128]{1,0:T(1,128)}', space=vmem, size = 0x12000, scoped, tag = 'internal scratch']
  #allocation2 [shape = 'f32[16,128]{1,0:T(8,128)}', space=vmem, size = 0x2000, scoped, tag = 'scratch operand']
  %s0 = inlined_call_operand.hbm [shape: f32[16,128], index: 0, kind: input, shape index: {}]
  %s1 = inlined_call_operand.hbm [shape: f32[16,128], index: 1, kind: input, shape index: {}]
  %s2 = inlined_call_operand.hbm [shape: f32[1,1], index: 2, kind: output, shape index: {}]
  %s3 = sld [smem:[#allocation0]]
  $region34: #{tpu_custom_call.1} parent=0
    _
  %s5 = ssub.s32 1, %s3
  %s6 = scalar_select 0, %s5, %s3
  $region1: #{tpu_custom_call.1} parent=0
    #allocation3 [shape = 'u8[8192]{0}', space=vmem, size = 0x2000, scoped, tag = 'input window, operand 0, single buffered']
    #allocation4 [shape = 's32[1]{0}', space=sflag, size = 0x4, scoped, tag = 'scoped memory for tpu_custom_call.1']
    #allocation5 [shape = 's32[1]{0}', space=sflag, size = 0x4, scoped, tag = 'scoped memory for tpu_custom_call.1']
    #allocation6 [shape = 'u8[8192]{0}', space=vmem, size = 0x2000, scoped, tag = 'input window, operand 1, single buffered']
    #allocation7 [shape = 's32[1]{0}', space=sflag, size = 0x4, scoped, tag = 'scoped memory for tpu_custom_call.1']
    #allocation8 [shape = 'u8[512]{0}', space=smem, size = 0x200, scoped, tag = 'output window, operand 0, single buffered']
    %7 = vsyncpa [#allocation4], 0
    %8 = vsyncpa [#allocation7], 0
    %9 = vsyncpa [#allocation5], 0
    // Predicated region
    $region2: #{tpu_custom_call.1} parent=1 // pred_check
      _
    $region3: #{tpu_custom_call.1} parent=1 // pred_check_branch
      %11 = sbr.rel (0) target = $region5
    $region4: #{tpu_custom_call.1} parent=1 // pred_region
      %s12 = sadd.s32 0, 0
      %s13 = smul.u32 2, %s12
      %s15 = ssub.s32 256, 256
      %16 = vsyncadd [#allocation4], %s15
      %s17 = smul.addr %s13, 128
      %s18 = scalar_lea.hbm %s0, %s17
      %s19 = sshll.u32 [#allocation3], 4
      %s20 = int_to_ptr.vmem [resolvable:$true] %s19
      %25 = dma.hbm_to_vmem [thread:$0]  %s18, 256, %s20, [#allocation4], 128, 128, 8
    $region5: #{tpu_custom_call.1} parent=1 // pred_fallthru
      _
    // Predicated region
    $region6: #{tpu_custom_call.1} parent=1 // pred_check
      _
    $region7: #{tpu_custom_call.1} parent=1 // pred_check_branch
      %27 = sbr.rel (0) target = $region9
    $region8: #{tpu_custom_call.1} parent=1 // pred_region
      %s28 = sadd.s32 0, 0
      %s29 = smul.u32 2, %s28
      %s31 = ssub.s32 256, 256
      %32 = vsyncadd [#allocation7], %s31
      %s33 = smul.addr %s29, 128
      %s34 = scalar_lea.hbm %s1, %s33
      %s35 = sshll.u32 [#allocation6], 4
      %s36 = int_to_ptr.vmem [resolvable:$true] %s35
      %41 = dma.hbm_to_vmem [thread:$0]  %s34, 256, %s36, [#allocation7], 128, 128, 8
    $region9: #{tpu_custom_call.1} parent=1 // pred_fallthru
      _
    // Predicated region
    $region10: #{tpu_custom_call.1} parent=1 // pred_check
      _
    $region11: #{tpu_custom_call.1} parent=1 // pred_check_branch
      %43 = sbr.rel (0) target = $region13
    $region12: #{tpu_custom_call.1} parent=1 // pred_region
      %44 = dma.done [#allocation4], 256
    $region13: #{tpu_custom_call.1} parent=1 // pred_fallthru
      _
    // Predicated region
    $region14: #{tpu_custom_call.1} parent=1 // pred_check
      _
    $region15: #{tpu_custom_call.1} parent=1 // pred_check_branch
      %46 = sbr.rel (0) target = $region17
    $region16: #{tpu_custom_call.1} parent=1 // pred_region
      %47 = dma.done [#allocation7], 256
    $region17: #{tpu_custom_call.1} parent=1 // pred_fallthru
      _
    %s48 = sadd.s32 0, 0
    %s49 = smul.u32 2, %s48
    %s50 = sadd.s32 0, 0
    %s51 = smul.u32 2, %s50
    %p52 = scmp.eq.s32.totalorder 0, 0
    // Predicated region
    $region18: #{tpu_custom_call.1} parent=1 // pred_check
      %p53 = pneg %p52
    $region19: #{tpu_custom_call.1} parent=1 // pred_check_branch
      %55 = sbr.rel (%p53) target = $region21
    $region20: #{tpu_custom_call.1} parent=1 // pred_region
      %56 = vst [vmem:[#allocation2] sm:$0xff] 0.0
      %57 = vst [vmem:[#allocation2 + $0x8] sm:$0xff] 0.0
    $region21: #{tpu_custom_call.1} parent=1 // pred_fallthru
      _
    %v58 = vld [vmem:[#allocation3] sm:$0xff]
    %v59 = vld [vmem:[#allocation3 + $0x8] sm:$0xff]
    %v60 = vld [vmem:[#allocation6] sm:$0xff]
    %v61 = vld [vmem:[#allocation6 + $0x8] sm:$0xff]
    %v62 = vsub.f32 %v58, %v60
    %v63 = vsub.f32 %v59, %v61
    %v64 = vmul.f32 %v62, %v62
    %v65 = vmul.f32 %v63, %v63
    %v66 = vld [vmem:[#allocation2] sm:$0xff]
    %v67 = vld [vmem:[#allocation2 + $0x8] sm:$0xff]
    %v68 = vadd.f32 %v66, %v64
    %v69 = vadd.f32 %v67, %v65
    %70 = vst [vmem:[#allocation2] sm:$0xff] %v68
    %71 = vst [vmem:[#allocation2 + $0x8] sm:$0xff] %v69
    // Predicated region
    $region22: #{tpu_custom_call.1} parent=1 // pred_check
      %p72 = pneg %p52
    $region23: #{tpu_custom_call.1} parent=1 // pred_check_branch
      %74 = sbr.rel (%p72) target = $region25
    $region24: #{tpu_custom_call.1} parent=1 // pred_region
      %v75 = vld [vmem:[#allocation2] sm:$0xff]
      %v76 = vld [vmem:[#allocation2 + $0x8] sm:$0xff]
      %v77 = vadd.f32 %v75, %v76
      %78 = vadd.xlane.f32.xlu0 %v77
      %v79 = vpop.xlane.xlu0 %78
      %v80 = vrot.slane %v79, 4
      %v81 = vadd.f32 %v79, %v80
      %v82 = vrot.slane %v81, 2
      %v83 = vadd.f32 %v81, %v82
      %v84 = vrot.slane %v83, 1
      %v85 = vadd.f32 %v83, %v84
      %s86 = vtos %v85
      %s87 = scalar_lea.smem [#allocation8], 0
      %88 = sst [smem:[%s87]] %s86
    $region25: #{tpu_custom_call.1} parent=1 // pred_fallthru
      _
    // Predicated region
    $region26: #{tpu_custom_call.1} parent=1 // pred_check
      _
    $region27: #{tpu_custom_call.1} parent=1 // pred_check_branch
      %90 = sbr.rel (0) target = $region29
    $region28: #{tpu_custom_call.1} parent=1 // pred_region
      %s92 = ssub.s32 16, 16
      %93 = vsyncadd [#allocation5], %s92
      %96 = dma.smem_to_hbm [#allocation8], 16, %s2, [#allocation5]
    $region29: #{tpu_custom_call.1} parent=1 // pred_fallthru
      _
    // Predicated region
    $region30: #{tpu_custom_call.1} parent=1 // pred_check
      _
    $region31: #{tpu_custom_call.1} parent=1 // pred_check_branch
      %98 = sbr.rel (0) target = $region33
    $region32: #{tpu_custom_call.1} parent=1 // pred_region
      %99 = dma.done [#allocation5], 16
    $region33: #{tpu_custom_call.1} parent=1 // pred_fallthru
      _
    %100 = sfence
    %101 = vsyncpa [#allocation4], 1
    %102 = vsyncpa [#allocation7], 1
    %103 = vsyncpa [#allocation5], 1

</llo_original>
